<compile_context>
chip_gen: v6e
topology: v6e:2x2x1
jax: 0.10.0
libtpu: 0.0.40
codegen_flags: <defaults>
</compile_context>

<pallas_src>
import jax
import jax.numpy as jnp
from jax.experimental import pallas as pl
from jax.experimental.pallas import tpu as pltpu


NUM_CLASSES = 10
NODES_PER_GRAPH = 16      # the model's forward() assumes 16 nodes per graph
LOGIT_PAD = 128           # lane-dense width for the final store

# Packed-parameter slab layout: name -> (row_offset, n_rows, n_cols).
# Row offsets are 8-aligned so every in-kernel ref slice starts on a
# sublane-tile boundary (cheap static views).
_P_LAYOUT = {
    "w1":  (0,    2,  16),
    "b1":  (8,    1,  16),
    "w2":  (16,  16,  32),
    "b2":  (32,   1,  32),
    "w3":  (40,  32,  48),
    "b3":  (72,   1,  48),
    "lw1": (80,  48,  24),
    "lb1": (128,  1,  24),
    "lw2": (136, 24, LOGIT_PAD),   # last linear, zero-padded to 128 out lanes
    "lb2": (160,  1, LOGIT_PAD),
}
_P_ROWS = 168             # 8-aligned total rows
_P_LANES = 128


# ----------------------------- Pallas kernel --------------------------------

def _pslice(p_ref, name):
    r, nr, nc = _P_LAYOUT[name]
    return p_ref[r:r + nr, 0:nc]


def net_fused_kernel(a_ref, x_ref, p_ref, o_ref):
    """Fused per-graph-group forward: 3x GCN layer, segment max-pool, MLP."""
    gp, npg, _ = a_ref.shape                       # graphs-per-tile, 16
    a = a_ref[...].astype(jnp.float32)             # (gp, 16, 16) bf16 -> f32 once
    h = x_ref[...].reshape(gp * npg, -1)           # (gp*16, 2)

    def gcn(h2d, wname, bname):
        w = _pslice(p_ref, wname)                  # (cin, cout)
        b = _pslice(p_ref, bname)                  # (1, cout)
        cout = w.shape[1]
        # Feature transform: one 2-D matmul over all node rows of the group
        # (the degenerate K=2 first layer stays on the otherwise-idle MXU).
        xw = jnp.dot(h2d, w, preferred_element_type=jnp.float32)
        # Propagation: block-diagonal A_hat => batched (16,16)@(16,cout).
        ax = jnp.einsum("gij,gjc->gic", a, xw.reshape(gp, npg, cout),
                        preferred_element_type=jnp.float32)
        return jnp.maximum(ax.reshape(gp * npg, cout) + b, 0.0)

    h = gcn(h, "w1", "b1")                         # (gp*16, 16)
    h = gcn(h, "w2", "b2")                         # (gp*16, 32)
    h = gcn(h, "w3", "b3")                         # (gp*16, 48)

    # scatter_max(h, batch): nodes are contiguous per graph (16 each), so this
    # is a plain sublane max over each graph's rows - no masked broadcast.
    pooled = jnp.max(h.reshape(gp, npg, h.shape[1]), axis=1)    # (gp, 48)

    z = jnp.maximum(
        jnp.dot(pooled, _pslice(p_ref, "lw1"),
                preferred_element_type=jnp.float32) + _pslice(p_ref, "lb1"),
        0.0)
    # Only HBM store: lane-dense (gp, 128) unmasked vst; wrapper trims to 10.
    o_ref[...] = (jnp.dot(z, _pslice(p_ref, "lw2"),
                          preferred_element_type=jnp.float32)
                  + _pslice(p_ref, "lb2"))
    # NOTE: jnp.dot uses TPU default matmul precision (bf16 passes); pass
    # precision=jax.lax.Precision.HIGHEST if closer f32 parity with PyTorch
    # is required (~3x MXU cost).


# ------------------------------- JAX glue -----------------------------------

def pack_params(params):
    """Concatenate all parameters into one (8,128)-padded f32 slab (1 DMA)."""
    slab = jnp.zeros((_P_ROWS, _P_LANES), jnp.float32)
    for name, (r, nr, nc) in _P_LAYOUT.items():
        arr = params[name]
        assert arr.shape == (nr, nc), (name, arr.shape)
        slab = slab.at[r:r + nr, 0:nc].set(arr)
    return slab


def net_forward(params, x_blk, a_blk, graphs_per_tile=8):
    """normal_gcn == True path: the non-local block is skipped.

    x_blk: (G, 16, 2) node features; a_blk: (G, 16, 16) per-graph A_hat blocks.
    """
    g, npg, cin = x_blk.shape
    gp = min(graphs_per_tile, g)       # 8 graphs -> 128 node rows per A-tile
    assert g % gp == 0, "pad the batch to a multiple of graphs_per_tile"
    num_groups = g // gp

    # bf16 A_hat halves the dominant DMA/VMEM bytes; matmuls already run at
    # default (bf16-pass) MXU precision, so the accuracy impact is nil.
    a_blk = a_blk.astype(jnp.bfloat16)
    slab = pack_params(params)

    def data_spec(block_shape, index_map):
        if num_groups == 1:  # single grid step: double-buffering is pure waste
            return pl.BlockSpec(block_shape, index_map,
                                pipeline_mode=pl.Buffered(1))
        return pl.BlockSpec(block_shape, index_map)

    # Advisory cost hint: this kernel is launch/latency bound at small sizes.
    flops = (2 * g * npg * (cin * 16 + npg * 16 + 16 * 32 + npg * 32
                            + 32 * 48 + npg * 48)
             + 2 * g * (48 * 24 + 24 * LOGIT_PAD))
    bytes_accessed = (a_blk.size * 2 + x_blk.size * 4 + slab.size * 4
                      + g * LOGIT_PAD * 4)

    out_pad = pl.pallas_call(
        net_fused_kernel,
        out_shape=jax.ShapeDtypeStruct((g, LOGIT_PAD), jnp.float32),
        grid=(num_groups,),
        in_specs=[
            data_spec((gp, npg, npg), lambda i: (i, 0, 0)),    # A_hat blocks
            data_spec((gp, npg, cin), lambda i: (i, 0, 0)),    # node features
            # Parameter slab: same block every step -> never double-buffer.
            pl.BlockSpec((_P_ROWS, _P_LANES), lambda i: (0, 0),
                         pipeline_mode=pl.Buffered(1)),
        ],
        out_specs=pl.BlockSpec((gp, LOGIT_PAD), lambda i: (i, 0)),
        compiler_params=pltpu.CompilerParams(
            # Graph groups are independent -> shardable across v7x's 2 TCs.
            dimension_semantics=("parallel",)),
        cost_estimate=pl.CostEstimate(flops=flops, transcendentals=0,
                                      bytes_accessed=bytes_accessed),
        # TODO(synk): per-step VMEM is only ~100 KiB (gp=8: 4 KiB A + 84 KiB
        # params + activations), far under the scoped defaults and v7x's 64 MiB
        # per-TC VMEM; if gp is ever raised a lot, set vmem_limit_bytes here.
    )(a_blk, x_blk, slab)

    return out_pad[:, :NUM_CLASSES]


def build_norm_adj_blocks(edge_index, num_graphs, nodes_per_graph):
    """Per-graph dense A_hat = D^-1/2 (A + I) D^-1/2 blocks, shape (G, 16, 16).

    Batched PyG data has no cross-graph edges, so the full (N, N) A_hat is
    block-diagonal and only its diagonal blocks need to be materialized.
    """
    n = num_graphs * nodes_per_graph
    a = jnp.zeros((n, n), jnp.float32)
    # .add (not .set): PyG's GCNConv counts duplicate edges in the degree; the
    # example edge list below has no duplicates, so either choice matches.
    a = a.at[edge_index[0], edge_index[1]].add(1.0)
    a = a + jnp.eye(n, dtype=jnp.float32)
    deg = a.sum(axis=1)
    d_inv_sqrt = jnp.where(deg > 0, 1.0 / jnp.sqrt(deg), 0.0)
    a_hat = d_inv_sqrt[:, None] * a * d_inv_sqrt[None, :]
    idx = jnp.arange(num_graphs)
    a4 = a_hat.reshape(num_graphs, nodes_per_graph, num_graphs, nodes_per_graph)
    return a4[idx, :, idx, :]                      # diagonal blocks (G, 16, 16)


def init_params(key):
    ks = jax.random.split(key, 8)

    def glorot(k, shape):
        fan_in, fan_out = shape
        lim = jnp.sqrt(6.0 / (fan_in + fan_out))
        return jax.random.uniform(k, shape, jnp.float32, -lim, lim)

    lw2 = glorot(ks[5], (24, NUM_CLASSES))
    lb2 = jax.random.uniform(ks[6], (1, NUM_CLASSES), jnp.float32, -0.1, 0.1)
    # Zero-pad the last linear layer to 128 output lanes once (outside the hot
    # path) so the kernel's only HBM store is lane-dense.
    lw2_pad = jnp.zeros((24, LOGIT_PAD), jnp.float32).at[:, :NUM_CLASSES].set(lw2)
    lb2_pad = jnp.zeros((1, LOGIT_PAD), jnp.float32).at[:, :NUM_CLASSES].set(lb2)

    return {
        # GCN weights; biases stored as (1, C) rows for the packed slab.
        "w1": glorot(ks[0], (2, 16)),   "b1": jnp.zeros((1, 16), jnp.float32),
        "w2": glorot(ks[1], (16, 32)),  "b2": jnp.zeros((1, 32), jnp.float32),
        "w3": glorot(ks[2], (32, 48)),  "b3": jnp.zeros((1, 48), jnp.float32),
        "lw1": glorot(ks[3], (48, 24)),
        "lb1": jax.random.uniform(ks[4], (1, 24), jnp.float32, -0.1, 0.1),
        "lw2": lw2_pad, "lb2": lb2_pad,
    }


# TODO(synk): non-local blocks (NONEmbed_gaussian / NONGaussian / NONConcate /
# NONDot_product) are not exercised because the default args path sets
# normal_gcn=True; conv4/conv5/conv6 are dead parameters in forward().


if __name__ == "__main__":
    num_graphs = 2                         # args.batch
    num_nodes = num_graphs * NODES_PER_GRAPH

    key = jax.random.PRNGKey(0)
    k_x, k_p = jax.random.split(key)

    # Node features [N, 2]
    x = jax.random.normal(k_x, (num_nodes, 2), jnp.float32)

    # edge_index [2, E]: symmetric ring inside each graph (no cross-graph edges)
    edges = []
    for gi in range(num_graphs):
        base = gi * NODES_PER_GRAPH
        for i in range(NODES_PER_GRAPH):
            u, v = base + i, base + (i + 1) % NODES_PER_GRAPH
            edges.append((u, v))
            edges.append((v, u))
    edge_index = jnp.array(edges, dtype=jnp.int32).T            # (2, 64)

    a_blk = build_norm_adj_blocks(edge_index, num_graphs, NODES_PER_GRAPH)
    x_blk = x.reshape(num_graphs, NODES_PER_GRAPH, 2)
    params = init_params(k_p)

    out = net_forward(params, x_blk, a_blk)                     # (G, 10)
    out = jax.block_until_ready(out)

    assert out.shape == (num_graphs, NUM_CLASSES), out.shape
    assert bool(jnp.all(jnp.isfinite(out)))
    print("KERNEL_OK")
</pallas_src>

<mosaic_0001>
module attributes {stable_mosaic.version = 11 : i64} {
  func.func @net_fused_kernel(%arg0: i32, %arg1: memref<2x16x16xbf16, #tpu.memory_space<vmem>>, %arg2: memref<2x16x2xf32, #tpu.memory_space<vmem>>, %arg3: memref<168x128xf32, #tpu.memory_space<vmem>>, %arg4: memref<2x128xf32, #tpu.memory_space<vmem>>) attributes {dimension_semantics = [#tpu.dimension_semantics<parallel>], iteration_bounds = array<i64: 1>, scalar_prefetch = 0 : i64, scratch_operands = 0 : i64, tpu.core_type = #tpu.core_type<tc>, window_params = [{pipeline_mode = #tpu.pipeline_mode<synchronous>, transform_indices = @transform_0, window_bounds = array<i64: 2, 16, 16>}, {pipeline_mode = #tpu.pipeline_mode<synchronous>, transform_indices = @transform_1, window_bounds = array<i64: 2, 16, 2>}, {pipeline_mode = #tpu.pipeline_mode<synchronous>, transform_indices = @transform_2, window_bounds = array<i64: 168, 128>}, {transform_indices = @transform_3, window_bounds = array<i64: 2, 128>}]} {
    %c0 = arith.constant 0 : index
    %c0_0 = arith.constant 0 : index
    %c0_1 = arith.constant 0 : index
    %0 = vector.load %arg1[%c0, %c0_0, %c0_1] : memref<2x16x16xbf16, #tpu.memory_space<vmem>>, vector<2x16x16xbf16>
    %1 = arith.extf %0 : vector<2x16x16xbf16> to vector<2x16x16xf32>
    %c0_2 = arith.constant 0 : index
    %c0_3 = arith.constant 0 : index
    %c0_4 = arith.constant 0 : index
    %2 = vector.load %arg2[%c0_2, %c0_3, %c0_4] : memref<2x16x2xf32, #tpu.memory_space<vmem>>, vector<2x16x2xf32>
    %3 = vector.shape_cast %2 : vector<2x16x2xf32> to vector<32x2xf32>
    %c0_5 = arith.constant 0 : index
    %c0_6 = arith.constant 0 : index
    %4 = vector.load %arg3[%c0_5, %c0_6] : memref<168x128xf32, #tpu.memory_space<vmem>>, vector<2x16xf32>
    %c8 = arith.constant 8 : index
    %c0_7 = arith.constant 0 : index
    %5 = vector.load %arg3[%c8, %c0_7] : memref<168x128xf32, #tpu.memory_space<vmem>>, vector<1x16xf32>
    %cst = arith.constant dense<0.000000e+00> : vector<32x16xf32>
    %6 = tpu.matmul %3, %4, %cst {dimension_numbers = #tpu.dot_dimension_numbers<[1], [0], [0], [1], [0, 0, 1, 1], [], []>} : vector<32x2xf32>, vector<2x16xf32>, vector<32x16xf32> -> vector<32x16xf32>
    %7 = vector.shape_cast %6 : vector<32x16xf32> to vector<2x16x16xf32>
    "tpu.trace_start"() <{level = 10 : i32, message = "gij,gjc->gic"}> : () -> ()
    %cst_8 = arith.constant dense<0.000000e+00> : vector<2x16x16xf32>
    %8 = tpu.matmul %1, %7, %cst_8 {dimension_numbers = #tpu.dot_dimension_numbers<[2], [1], [1], [2], [0, 0, 0, 1, 1, 2], [0], [0]>} : vector<2x16x16xf32>, vector<2x16x16xf32>, vector<2x16x16xf32> -> vector<2x16x16xf32>
    "tpu.trace_stop"() : () -> ()
    %9 = vector.shape_cast %8 : vector<2x16x16xf32> to vector<32x16xf32>
    %10 = vector.broadcast %5 : vector<1x16xf32> to vector<32x16xf32>
    %11 = arith.addf %9, %10 : vector<32x16xf32>
    %cst_9 = arith.constant 0.000000e+00 : f32
    %12 = vector.broadcast %cst_9 : f32 to vector<32x16xf32>
    %13 = arith.maximumf %11, %12 : vector<32x16xf32>
    %c16 = arith.constant 16 : index
    %c0_10 = arith.constant 0 : index
    %14 = vector.load %arg3[%c16, %c0_10] : memref<168x128xf32, #tpu.memory_space<vmem>>, vector<16x32xf32>
    %c32 = arith.constant 32 : index
    %c0_11 = arith.constant 0 : index
    %15 = vector.load %arg3[%c32, %c0_11] : memref<168x128xf32, #tpu.memory_space<vmem>>, vector<1x32xf32>
    %cst_12 = arith.constant dense<0.000000e+00> : vector<32x32xf32>
    %16 = tpu.matmul %13, %14, %cst_12 {dimension_numbers = #tpu.dot_dimension_numbers<[1], [0], [0], [1], [0, 0, 1, 1], [], []>} : vector<32x16xf32>, vector<16x32xf32>, vector<32x32xf32> -> vector<32x32xf32>
    %17 = vector.shape_cast %16 : vector<32x32xf32> to vector<2x16x32xf32>
    "tpu.trace_start"() <{level = 10 : i32, message = "gij,gjc->gic"}> : () -> ()
    %cst_13 = arith.constant dense<0.000000e+00> : vector<2x16x32xf32>
    %18 = tpu.matmul %1, %17, %cst_13 {dimension_numbers = #tpu.dot_dimension_numbers<[2], [1], [1], [2], [0, 0, 0, 1, 1, 2], [0], [0]>} : vector<2x16x16xf32>, vector<2x16x32xf32>, vector<2x16x32xf32> -> vector<2x16x32xf32>
    "tpu.trace_stop"() : () -> ()
    %19 = vector.shape_cast %18 : vector<2x16x32xf32> to vector<32x32xf32>
    %20 = vector.broadcast %15 : vector<1x32xf32> to vector<32x32xf32>
    %21 = arith.addf %19, %20 : vector<32x32xf32>
    %cst_14 = arith.constant 0.000000e+00 : f32
    %22 = vector.broadcast %cst_14 : f32 to vector<32x32xf32>
    %23 = arith.maximumf %21, %22 : vector<32x32xf32>
    %c40 = arith.constant 40 : index
    %c0_15 = arith.constant 0 : index
    %24 = vector.load %arg3[%c40, %c0_15] : memref<168x128xf32, #tpu.memory_space<vmem>>, vector<32x48xf32>
    %c72 = arith.constant 72 : index
    %c0_16 = arith.constant 0 : index
    %25 = vector.load %arg3[%c72, %c0_16] : memref<168x128xf32, #tpu.memory_space<vmem>>, vector<1x48xf32>
    %cst_17 = arith.constant dense<0.000000e+00> : vector<32x48xf32>
    %26 = tpu.matmul %23, %24, %cst_17 {dimension_numbers = #tpu.dot_dimension_numbers<[1], [0], [0], [1], [0, 0, 1, 1], [], []>} : vector<32x32xf32>, vector<32x48xf32>, vector<32x48xf32> -> vector<32x48xf32>
    %27 = vector.shape_cast %26 : vector<32x48xf32> to vector<2x16x48xf32>
    "tpu.trace_start"() <{level = 10 : i32, message = "gij,gjc->gic"}> : () -> ()
    %cst_18 = arith.constant dense<0.000000e+00> : vector<2x16x48xf32>
    %28 = tpu.matmul %1, %27, %cst_18 {dimension_numbers = #tpu.dot_dimension_numbers<[2], [1], [1], [2], [0, 0, 0, 1, 1, 2], [0], [0]>} : vector<2x16x16xf32>, vector<2x16x48xf32>, vector<2x16x48xf32> -> vector<2x16x48xf32>
    "tpu.trace_stop"() : () -> ()
    %29 = vector.shape_cast %28 : vector<2x16x48xf32> to vector<32x48xf32>
    %30 = vector.broadcast %25 : vector<1x48xf32> to vector<32x48xf32>
    %31 = arith.addf %29, %30 : vector<32x48xf32>
    %cst_19 = arith.constant 0.000000e+00 : f32
    %32 = vector.broadcast %cst_19 : f32 to vector<32x48xf32>
    %33 = arith.maximumf %31, %32 : vector<32x48xf32>
    %34 = vector.shape_cast %33 : vector<32x48xf32> to vector<2x16x48xf32>
    %cst_20 = arith.constant dense<0xFF800000> : vector<2x48xf32>
    %35 = vector.multi_reduction <maximumf>, %34, %cst_20 [1] : vector<2x16x48xf32> to vector<2x48xf32>
    %c80 = arith.constant 80 : index
    %c0_21 = arith.constant 0 : index
    %36 = vector.load %arg3[%c80, %c0_21] : memref<168x128xf32, #tpu.memory_space<vmem>>, vector<48x24xf32>
    %cst_22 = arith.constant dense<0.000000e+00> : vector<2x24xf32>
    %37 = tpu.matmul %35, %36, %cst_22 {dimension_numbers = #tpu.dot_dimension_numbers<[1], [0], [0], [1], [0, 0, 1, 1], [], []>} : vector<2x48xf32>, vector<48x24xf32>, vector<2x24xf32> -> vector<2x24xf32>
    %c128 = arith.constant 128 : index
    %c0_23 = arith.constant 0 : index
    %38 = vector.load %arg3[%c128, %c0_23] : memref<168x128xf32, #tpu.memory_space<vmem>>, vector<1x24xf32>
    %39 = vector.broadcast %38 : vector<1x24xf32> to vector<2x24xf32>
    %40 = arith.addf %37, %39 : vector<2x24xf32>
    %cst_24 = arith.constant 0.000000e+00 : f32
    %41 = vector.broadcast %cst_24 : f32 to vector<2x24xf32>
    %42 = arith.maximumf %40, %41 : vector<2x24xf32>
    %c136 = arith.constant 136 : index
    %c0_25 = arith.constant 0 : index
    %43 = vector.load %arg3[%c136, %c0_25] : memref<168x128xf32, #tpu.memory_space<vmem>>, vector<24x128xf32>
    %cst_26 = arith.constant dense<0.000000e+00> : vector<2x128xf32>
    %44 = tpu.matmul %42, %43, %cst_26 {dimension_numbers = #tpu.dot_dimension_numbers<[1], [0], [0], [1], [0, 0, 1, 1], [], []>} : vector<2x24xf32>, vector<24x128xf32>, vector<2x128xf32> -> vector<2x128xf32>
    %c160 = arith.constant 160 : index
    %c0_27 = arith.constant 0 : index
    %45 = vector.load %arg3[%c160, %c0_27] : memref<168x128xf32, #tpu.memory_space<vmem>>, vector<1x128xf32>
    %46 = vector.broadcast %45 : vector<1x128xf32> to vector<2x128xf32>
    %47 = arith.addf %44, %46 : vector<2x128xf32>
    %c0_28 = arith.constant 0 : index
    %c0_29 = arith.constant 0 : index
    %48 = vector.load %arg4[%c0_28, %c0_29] : memref<2x128xf32, #tpu.memory_space<vmem>>, vector<2x128xf32>
    tpu.vector_store %arg4[%c0_28, %c0_29], %47 {strides = array<i32>} : memref<2x128xf32, #tpu.memory_space<vmem>>, vector<2x128xf32>,
    return
  }
  func.func @transform_0(%arg0: i32) -> (i32, i32, i32) {
    %c0_i32 = arith.constant 0 : i32
    %c0_i32_0 = arith.constant 0 : i32
    %c0_i32_1 = arith.constant 0 : i32
    return %arg0, %c0_i32, %c0_i32_0 : i32, i32, i32
  }
  func.func @transform_1(%arg0: i32) -> (i32, i32, i32) {
    %c0_i32 = arith.constant 0 : i32
    %c0_i32_0 = arith.constant 0 : i32
    %c0_i32_1 = arith.constant 0 : i32
    return %arg0, %c0_i32, %c0_i32_0 : i32, i32, i32
  }
  func.func @transform_2(%arg0: i32) -> (i32, i32) {
    %c0_i32 = arith.constant 0 : i32
    %c0_i32_0 = arith.constant 0 : i32
    %c0_i32_1 = arith.constant 0 : i32
    return %c0_i32, %c0_i32_0 : i32, i32
  }
  func.func @transform_3(%arg0: i32) -> (i32, i32) {
    %c0_i32 = arith.constant 0 : i32
    %c0_i32_0 = arith.constant 0 : i32
    return %arg0, %c0_i32 : i32, i32
  }
}

</mosaic_0001>

<llo_original>
// kernel: tpu_custom_call.1
$region0: #{tpu_custom_call.1}
  #allocation0 [shape = 'u32[]', space=smem, size = 0x4, offset = 0x4, fixed_abs, tag = 'smem constant byte address 0x4 - core index']
  #allocation1 [shape = 'u32[144,128]{1,0:T(1,128)}', space=vmem, size = 0x12000, scoped, tag = 'internal scratch']
  %s0 = inlined_call_operand.vmem [shape: bf16[2,16,16], index: 0, kind: input, shape index: {}]
  %s1 = inlined_call_operand.vmem [shape: f32[2,16,2], index: 1, kind: input, shape index: {}]
  %s2 = inlined_call_operand.hbm [shape: f32[168,128], index: 2, kind: input, shape index: {}]
  %s3 = inlined_call_operand.hbm [shape: f32[2,128], index: 3, kind: output, shape index: {}]
  %s4 = sld [smem:[#allocation0]]
  $region26: #{tpu_custom_call.1} parent=0
    _
  %s6 = ssub.s32 1, %s4
  %s7 = scalar_select 0, %s6, %s4
  $region1: #{tpu_custom_call.1} parent=0
    #allocation2 [shape = 'u8[86016]{0}', space=vmem, size = 0x15000, scoped, tag = 'input window, operand 2, single buffered']
    #allocation3 [shape = 's32[1]{0}', space=sflag, size = 0x4, scoped, tag = 'scoped memory for tpu_custom_call.1']
    #allocation4 [shape = 's32[1]{0}', space=sflag, size = 0x4, scoped, tag = 'scoped memory for tpu_custom_call.1']
    #allocation5 [shape = 'u8[1024]{0}', space=vmem, size = 0x400, scoped, tag = 'output window, operand 0, single buffered']
    %8 = vsyncpa [#allocation3], 0
    %9 = vsyncpa [#allocation4], 0
    // Predicated region
    $region2: #{tpu_custom_call.1} parent=1 // pred_check
      _
    $region3: #{tpu_custom_call.1} parent=1 // pred_check_branch
      %11 = sbr.rel (0) target = $region5
    $region4: #{tpu_custom_call.1} parent=1 // pred_region
      _
    $region5: #{tpu_custom_call.1} parent=1 // pred_fallthru
      _
    // Predicated region
    $region6: #{tpu_custom_call.1} parent=1 // pred_check
      _
    $region7: #{tpu_custom_call.1} parent=1 // pred_check_branch
      %13 = sbr.rel (0) target = $region9
    $region8: #{tpu_custom_call.1} parent=1 // pred_region
      _
    $region9: #{tpu_custom_call.1} parent=1 // pred_fallthru
      _
    // Predicated region
    $region10: #{tpu_custom_call.1} parent=1 // pred_check
      _
    $region11: #{tpu_custom_call.1} parent=1 // pred_check_branch
      %15 = sbr.rel (0) target = $region13
    $region12: #{tpu_custom_call.1} parent=1 // pred_region
      %s17 = ssub.s32 2688, 2688
      %18 = vsyncadd [#allocation3], %s17
      %s19 = sshll.u32 [#allocation2], 4
      %s20 = int_to_ptr.vmem [resolvable:$true] %s19
      %25 = dma.hbm_to_vmem [thread:$0]  %s2, 2688, %s20, [#allocation3], 128, 128, 8
    $region13: #{tpu_custom_call.1} parent=1 // pred_fallthru
      _
    // Predicated region
    $region14: #{tpu_custom_call.1} parent=1 // pred_check
      _
    $region15: #{tpu_custom_call.1} parent=1 // pred_check_branch
      %27 = sbr.rel (0) target = $region17
    $region16: #{tpu_custom_call.1} parent=1 // pred_region
      %28 = dma.done [#allocation3], 2688
    $region17: #{tpu_custom_call.1} parent=1 // pred_fallthru
      _
    %v29 = vld [vmem:[%s0] sm:$0xf]
    %v30 = vld [vmem:[%s0 + $0x4] sm:$0xf]
    %v31 = vld [vmem:[%s0 + $0x8] sm:$0xf]
    %v32 = vld [vmem:[%s0 + $0xc] sm:$0xf]
    %v33 = vunpack.c.l.bf16 %v29
    %v34 = vunpack.c.l.bf16 %v30
    %v35 = vunpack.c.l.bf16 %v31
    %v36 = vunpack.c.l.bf16 %v32
    %v37 = vld [vmem:[%s1] sm:$0xff]
    %v38 = vld [vmem:[%s1 + $0x8] sm:$0xff]
    %v39 = vld [vmem:[%s1 + $0x10] sm:$0xff]
    %v40 = vld [vmem:[%s1 + $0x18] sm:$0xff]
    %v41 = vld [vmem:[#allocation2] sm:$0x3]
    %v42 = vld [vmem:[#allocation2 + $0x8] sm:$0x1]
    %vm43 = vcmask 15360
    %v45 = vsel %vm43, %v37, 0
    %v48 = vsel %vm43, %v38, 0
    %v51 = vsel %vm43, %v39, 0
    %v54 = vsel %vm43, %v40, 0
    %vm56 = vcmask 1041408
    %v58 = vsel %vm56, %v41, 0
    %60 = vmatprep.subr.mxu0 0.0
    %61 = vmatpush1.msra.mxu0 0.0
    %62 = vmatprep.subr.mxu0 0.0
    %63 = vmatpush1.msra.mxu0 0.0
    %64 = vmatprep.subr.mxu0 0.0
    %65 = vmatpush1.msra.mxu0 0.0
    %66 = vmatprep.subr.mxu0 0.0
    %67 = vmatpush1.msra.mxu0 0.0
    %68 = vmatprep.subr.mxu0 0.0
    %69 = vmatpush1.msra.mxu0 0.0
    %70 = vmatprep.subr.mxu0 0.0
    %71 = vmatpush1.msra.mxu0 0.0
    %72 = vmatprep.subr.mxu0 0.0
    %73 = vmatpush1.msra.mxu0 0.0
    %74 = vmatprep.subr.mxu0 0.0
    %75 = vmatpush1.msra.mxu0 0.0
    %76 = vmatprep.subr.mxu0 0.0
    %77 = vmatpush1.msra.mxu0 0.0
    %78 = vmatprep.subr.mxu0 0.0
    %79 = vmatpush1.msra.mxu0 0.0
    %80 = vmatprep.subr.mxu0 0.0
    %81 = vmatpush1.msra.mxu0 0.0
    %82 = vmatprep.subr.mxu0 0.0
    %83 = vmatpush1.msra.mxu0 0.0
    %84 = vmatprep.subr.mxu0 0.0
    %85 = vmatpush1.msra.mxu0 0.0
    %86 = vmatprep.subr.mxu0 0.0
    %87 = vmatpush1.msra.mxu0 0.0
    %88 = vmatprep.subr.mxu0 0.0
    %89 = vmatpush1.msra.mxu0 0.0
    %90 = vmatprep.subr.mxu0 0.0
    %91 = vmatpush1.msra.mxu0 %v58
    %92 = vmatprep.subr.mxu0 0.0
    %93 = vmatpush2.msra.mxu0 0.0
    %94 = vmatprep.subr.mxu0 0.0
    %95 = vmatpush2.msra.mxu0 0.0
    %96 = vmatprep.subr.mxu0 0.0
    %97 = vmatpush2.msra.mxu0 0.0
    %98 = vmatprep.subr.mxu0 0.0
    %99 = vmatpush2.msra.mxu0 0.0
    %100 = vmatprep.subr.mxu0 0.0
    %101 = vmatpush2.msra.mxu0 0.0
    %102 = vmatprep.subr.mxu0 0.0
    %103 = vmatpush2.msra.mxu0 0.0
    %104 = vmatprep.subr.mxu0 0.0
    %105 = vmatpush2.msra.mxu0 0.0
    %106 = vmatprep.subr.mxu0 0.0
    %107 = vmatpush2.msra.mxu0 0.0
    %108 = vmatprep.subr.mxu0 0.0
    %109 = vmatpush2.msra.mxu0 0.0
    %110 = vmatprep.subr.mxu0 0.0
    %111 = vmatpush2.msra.mxu0 0.0
    %112 = vmatprep.subr.mxu0 0.0
    %113 = vmatpush2.msra.mxu0 0.0
    %114 = vmatprep.subr.mxu0 0.0
    %115 = vmatpush2.msra.mxu0 0.0
    %116 = vmatprep.subr.mxu0 0.0
    %117 = vmatpush2.msra.mxu0 0.0
    %118 = vmatprep.subr.mxu0 0.0
    %119 = vmatpush2.msra.mxu0 0.0
    %120 = vmatprep.subr.mxu0 0.0
    %121 = vmatpush2.msra.mxu0 0.0
    %122 = vmatprep.subr.mxu0 0.0
    %123 = vmatpush2.msra.mxu0 0.0
    %124 = vmatprep.mubr.f32.mxu0 0.0
    %125 = vmatmul.mubr.f32.gmra.mxu0 %v45
    %v126 = vpop.f32.mrf.mxu0
    %v127 = vadd.f32 0.0, %v126
    %v128 = vpop.f32.mrf.mxu0
    %129 = vmatprep.mubr.f32.mxu0 0.0
    %130 = vmatmul.mubr.f32.gmra.mxu0 %v48
    %v131 = vpop.f32.mrf.mxu0
    %v132 = vadd.f32 0.0, %v131
    %v133 = vpop.f32.mrf.mxu0
    %134 = vmatprep.mubr.f32.mxu0 0.0
    %135 = vmatmul.mubr.f32.gmra.mxu0 %v51
    %v136 = vpop.f32.mrf.mxu0
    %v137 = vadd.f32 0.0, %v136
    %v138 = vpop.f32.mrf.mxu0
    %139 = vmatprep.mubr.f32.mxu0 0.0
    %140 = vmatmul.mubr.f32.gmra.mxu0 %v54
    %v141 = vpop.f32.mrf.mxu0
    %v142 = vadd.f32 0.0, %v141
    %v143 = vpop.f32.mrf.mxu0
    %144 = vdwg.mxu0
    %vm145 = vcmask 130048
    %v147 = vsel %vm145, %v33, 0
    %v150 = vsel %vm145, %v34, 0
    %152 = vmatprep.subr.mxu0 0.0
    %153 = vmatpush1.msra.mxu0 0.0
    %154 = vmatprep.subr.mxu0 0.0
    %155 = vmatpush1.msra.mxu0 0.0
    %156 = vmatprep.subr.mxu0 0.0
    %157 = vmatpush1.msra.mxu0 0.0
    %158 = vmatprep.subr.mxu0 0.0
    %159 = vmatpush1.msra.mxu0 0.0
    %160 = vmatprep.subr.mxu0 0.0
    %161 = vmatpush1.msra.mxu0 0.0
    %162 = vmatprep.subr.mxu0 0.0
    %163 = vmatpush1.msra.mxu0 0.0
    %164 = vmatprep.subr.mxu0 0.0
    %165 = vmatpush1.msra.mxu0 0.0
    %166 = vmatprep.subr.mxu0 0.0
    %167 = vmatpush1.msra.mxu0 0.0
    %168 = vmatprep.subr.mxu0 0.0
    %169 = vmatpush1.msra.mxu0 0.0
    %170 = vmatprep.subr.mxu0 0.0
    %171 = vmatpush1.msra.mxu0 0.0
    %172 = vmatprep.subr.mxu0 0.0
    %173 = vmatpush1.msra.mxu0 0.0
    %174 = vmatprep.subr.mxu0 0.0
    %175 = vmatpush1.msra.mxu0 0.0
    %176 = vmatprep.subr.mxu0 0.0
    %177 = vmatpush1.msra.mxu0 0.0
    %178 = vmatprep.subr.mxu0 0.0
    %179 = vmatpush1.msra.mxu0 0.0
    %180 = vmatprep.subr.mxu0 0.0
    %181 = vmatpush1.msra.mxu0 %v132
    %182 = vmatprep.subr.mxu0 0.0
    %183 = vmatpush1.msra.mxu0 %v127
    %184 = vmatprep.subr.mxu0 0.0
    %185 = vmatpush2.msra.mxu0 0.0
    %186 = vmatprep.subr.mxu0 0.0
    %187 = vmatpush2.msra.mxu0 0.0
    %188 = vmatprep.subr.mxu0 0.0
    %189 = vmatpush2.msra.mxu0 0.0
    %190 = vmatprep.subr.mxu0 0.0
    %191 = vmatpush2.msra.mxu0 0.0
    %192 = vmatprep.subr.mxu0 0.0
    %193 = vmatpush2.msra.mxu0 0.0
    %194 = vmatprep.subr.mxu0 0.0
    %195 = vmatpush2.msra.mxu0 0.0
    %196 = vmatprep.subr.mxu0 0.0
    %197 = vmatpush2.msra.mxu0 0.0
    %198 = vmatprep.subr.mxu0 0.0
    %199 = vmatpush2.msra.mxu0 0.0
    %200 = vmatprep.subr.mxu0 0.0
    %201 = vmatpush2.msra.mxu0 0.0
    %202 = vmatprep.subr.mxu0 0.0
    %203 = vmatpush2.msra.mxu0 0.0
    %204 = vmatprep.subr.mxu0 0.0
    %205 = vmatpush2.msra.mxu0 0.0
    %206 = vmatprep.subr.mxu0 0.0
    %207 = vmatpush2.msra.mxu0 0.0
    %208 = vmatprep.subr.mxu0 0.0
    %209 = vmatpush2.msra.mxu0 0.0
    %210 = vmatprep.subr.mxu0 0.0
    %211 = vmatpush2.msra.mxu0 0.0
    %212 = vmatprep.subr.mxu0 0.0
    %213 = vmatpush2.msra.mxu0 0.0
    %214 = vmatprep.subr.mxu0 0.0
    %215 = vmatpush2.msra.mxu0 0.0
    %216 = vmatprep.mubr.f32.mxu0 0.0
    %217 = vmatmul.mubr.f32.gmra.mxu0 %v147
    %v218 = vpop.f32.mrf.mxu0
    %v219 = vadd.f32 0.0, %v218
    %v220 = vpop.f32.mrf.mxu0
    %221 = vmatprep.mubr.f32.mxu0 0.0
    %222 = vmatmul.mubr.f32.gmra.mxu0 %v150
    %v223 = vpop.f32.mrf.mxu0
    %v224 = vadd.f32 0.0, %v223
    %v225 = vpop.f32.mrf.mxu0
    %226 = vdwg.mxu0
    %v228 = vsel %vm145, %v35, 0
    %v231 = vsel %vm145, %v36, 0
    %233 = vmatprep.subr.mxu0 0.0
    %234 = vmatpush1.msra.mxu0 0.0
    %235 = vmatprep.subr.mxu0 0.0
    %236 = vmatpush1.msra.mxu0 0.0
    %237 = vmatprep.subr.mxu0 0.0
    %238 = vmatpush1.msra.mxu0 0.0
    %239 = vmatprep.subr.mxu0 0.0
    %240 = vmatpush1.msra.mxu0 0.0
    %241 = vmatprep.subr.mxu0 0.0
    %242 = vmatpush1.msra.mxu0 0.0
    %243 = vmatprep.subr.mxu0 0.0
    %244 = vmatpush1.msra.mxu0 0.0
    %245 = vmatprep.subr.mxu0 0.0
    %246 = vmatpush1.msra.mxu0 0.0
    %247 = vmatprep.subr.mxu0 0.0
    %248 = vmatpush1.msra.mxu0 0.0
    %249 = vmatprep.subr.mxu0 0.0
    %250 = vmatpush1.msra.mxu0 0.0
    %251 = vmatprep.subr.mxu0 0.0
    %252 = vmatpush1.msra.mxu0 0.0
    %253 = vmatprep.subr.mxu0 0.0
    %254 = vmatpush1.msra.mxu0 0.0
    %255 = vmatprep.subr.mxu0 0.0
    %256 = vmatpush1.msra.mxu0 0.0
    %257 = vmatprep.subr.mxu0 0.0
    %258 = vmatpush1.msra.mxu0 0.0
    %259 = vmatprep.subr.mxu0 0.0
    %260 = vmatpush1.msra.mxu0 0.0
    %261 = vmatprep.subr.mxu0 0.0
    %262 = vmatpush1.msra.mxu0 %v142
    %263 = vmatprep.subr.mxu0 0.0
    %264 = vmatpush1.msra.mxu0 %v137
    %265 = vmatprep.subr.mxu0 0.0
    %266 = vmatpush2.msra.mxu0 0.0
    %267 = vmatprep.subr.mxu0 0.0
    %268 = vmatpush2.msra.mxu0 0.0
    %269 = vmatprep.subr.mxu0 0.0
    %270 = vmatpush2.msra.mxu0 0.0
    %271 = vmatprep.subr.mxu0 0.0
    %272 = vmatpush2.msra.mxu0 0.0
    %273 = vmatprep.subr.mxu0 0.0
    %274 = vmatpush2.msra.mxu0 0.0
    %275 = vmatprep.subr.mxu0 0.0
    %276 = vmatpush2.msra.mxu0 0.0
    %277 = vmatprep.subr.mxu0 0.0
    %278 = vmatpush2.msra.mxu0 0.0
    %279 = vmatprep.subr.mxu0 0.0
    %280 = vmatpush2.msra.mxu0 0.0
    %281 = vmatprep.subr.mxu0 0.0
    %282 = vmatpush2.msra.mxu0 0.0
    %283 = vmatprep.subr.mxu0 0.0
    %284 = vmatpush2.msra.mxu0 0.0
    %285 = vmatprep.subr.mxu0 0.0
    %286 = vmatpush2.msra.mxu0 0.0
    %287 = vmatprep.subr.mxu0 0.0
    %288 = vmatpush2.msra.mxu0 0.0
    %289 = vmatprep.subr.mxu0 0.0
    %290 = vmatpush2.msra.mxu0 0.0
    %291 = vmatprep.subr.mxu0 0.0
    %292 = vmatpush2.msra.mxu0 0.0
    %293 = vmatprep.subr.mxu0 0.0
    %294 = vmatpush2.msra.mxu0 0.0
    %295 = vmatprep.subr.mxu0 0.0
    %296 = vmatpush2.msra.mxu0 0.0
    %297 = vmatprep.mubr.f32.mxu0 0.0
    %298 = vmatmul.mubr.f32.gmra.mxu0 %v228
    %v299 = vpop.f32.mrf.mxu0
    %v300 = vadd.f32 0.0, %v299
    %v301 = vpop.f32.mrf.mxu0
    %302 = vmatprep.mubr.f32.mxu0 0.0
    %303 = vmatmul.mubr.f32.gmra.mxu0 %v231
    %v304 = vpop.f32.mrf.mxu0
    %v305 = vadd.f32 0.0, %v304
    %v306 = vpop.f32.mrf.mxu0
    %307 = vdwg.mxu0
    %v308 = vlaneseq
    %v309 = vshrl.u32 %v308, 7
    %v310 = vsub.s32 0, %v309
    %v311 = vrot.slane %v42, %v310
    %v312 = vadd.f32 %v219, %v311
    %v313 = vadd.f32 %v224, %v311
    %v314 = vadd.f32 %v300, %v311
    %v315 = vadd.f32 %v305, %v311
    %v316 = vmax.f32 %v312, 0.0
    %v317 = vmax.f32 %v313, 0.0
    %v318 = vmax.f32 %v314, 0.0
    %v319 = vmax.f32 %v315, 0.0
    %v320 = vld [vmem:[#allocation2 + $0x10] sm:$0xff]
    %v321 = vld [vmem:[#allocation2 + $0x18] sm:$0xff]
    %v322 = vld [vmem:[#allocation2 + $0x20] sm:$0x1]
    %v324 = vsel %vm145, %v316, 0
    %v327 = vsel %vm145, %v317, 0
    %v330 = vsel %vm145, %v318, 0
    %v333 = vsel %vm145, %v319, 0
    %335 = vmatprep.subr.mxu0 0.0
    %336 = vmatpush1.msra.mxu0 0.0
    %337 = vmatprep.subr.mxu0 0.0
    %338 = vmatpush1.msra.mxu0 0.0
    %339 = vmatprep.subr.mxu0 0.0
    %340 = vmatpush1.msra.mxu0 0.0
    %341 = vmatprep.subr.mxu0 0.0
    %342 = vmatpush1.msra.mxu0 0.0
    %343 = vmatprep.subr.mxu0 0.0
    %344 = vmatpush1.msra.mxu0 0.0
    %345 = vmatprep.subr.mxu0 0.0
    %346 = vmatpush1.msra.mxu0 0.0
    %347 = vmatprep.subr.mxu0 0.0
    %348 = vmatpush1.msra.mxu0 0.0
    %349 = vmatprep.subr.mxu0 0.0
    %350 = vmatpush1.msra.mxu0 0.0
    %351 = vmatprep.subr.mxu0 0.0
    %352 = vmatpush1.msra.mxu0 0.0
    %353 = vmatprep.subr.mxu0 0.0
    %354 = vmatpush1.msra.mxu0 0.0
    %355 = vmatprep.subr.mxu0 0.0
    %356 = vmatpush1.msra.mxu0 0.0
    %357 = vmatprep.subr.mxu0 0.0
    %358 = vmatpush1.msra.mxu0 0.0
    %359 = vmatprep.subr.mxu0 0.0
    %360 = vmatpush1.msra.mxu0 0.0
    %361 = vmatprep.subr.mxu0 0.0
    %362 = vmatpush1.msra.mxu0 0.0
    %363 = vmatprep.subr.mxu0 0.0
    %364 = vmatpush1.msra.mxu0 %v321
    %365 = vmatprep.subr.mxu0 0.0
    %366 = vmatpush1.msra.mxu0 %v320
    %367 = vmatprep.subr.mxu0 0.0
    %368 = vmatpush2.msra.mxu0 0.0
    %369 = vmatprep.subr.mxu0 0.0
    %370 = vmatpush2.msra.mxu0 0.0
    %371 = vmatprep.subr.mxu0 0.0
    %372 = vmatpush2.msra.mxu0 0.0
    %373 = vmatprep.subr.mxu0 0.0
    %374 = vmatpush2.msra.mxu0 0.0
    %375 = vmatprep.subr.mxu0 0.0
    %376 = vmatpush2.msra.mxu0 0.0
    %377 = vmatprep.subr.mxu0 0.0
    %378 = vmatpush2.msra.mxu0 0.0
    %379 = vmatprep.subr.mxu0 0.0
    %380 = vmatpush2.msra.mxu0 0.0
    %381 = vmatprep.subr.mxu0 0.0
    %382 = vmatpush2.msra.mxu0 0.0
    %383 = vmatprep.subr.mxu0 0.0
    %384 = vmatpush2.msra.mxu0 0.0
    %385 = vmatprep.subr.mxu0 0.0
    %386 = vmatpush2.msra.mxu0 0.0
    %387 = vmatprep.subr.mxu0 0.0
    %388 = vmatpush2.msra.mxu0 0.0
    %389 = vmatprep.subr.mxu0 0.0
    %390 = vmatpush2.msra.mxu0 0.0
    %391 = vmatprep.subr.mxu0 0.0
    %392 = vmatpush2.msra.mxu0 0.0
    %393 = vmatprep.subr.mxu0 0.0
    %394 = vmatpush2.msra.mxu0 0.0
    %395 = vmatprep.subr.mxu0 0.0
    %396 = vmatpush2.msra.mxu0 0.0
    %397 = vmatprep.subr.mxu0 0.0
    %398 = vmatpush2.msra.mxu0 0.0
    %399 = vmatprep.mubr.f32.mxu0 0.0
    %400 = vmatmul.mubr.f32.gmra.mxu0 %v324
    %v401 = vpop.f32.mrf.mxu0
    %v402 = vadd.f32 0.0, %v401
    %v403 = vpop.f32.mrf.mxu0
    %404 = vmatprep.mubr.f32.mxu0 0.0
    %405 = vmatmul.mubr.f32.gmra.mxu0 %v327
    %v406 = vpop.f32.mrf.mxu0
    %v407 = vadd.f32 0.0, %v406
    %v408 = vpop.f32.mrf.mxu0
    %409 = vmatprep.mubr.f32.mxu0 0.0
    %410 = vmatmul.mubr.f32.gmra.mxu0 %v330
    %v411 = vpop.f32.mrf.mxu0
    %v412 = vadd.f32 0.0, %v411
    %v413 = vpop.f32.mrf.mxu0
    %414 = vmatprep.mubr.f32.mxu0 0.0
    %415 = vmatmul.mubr.f32.gmra.mxu0 %v333
    %v416 = vpop.f32.mrf.mxu0
    %v417 = vadd.f32 0.0, %v416
    %v418 = vpop.f32.mrf.mxu0
    %419 = vdwg.mxu0
    %420 = vmatprep.subr.mxu0 0.0
    %421 = vmatpush1.msra.mxu0 0.0
    %422 = vmatprep.subr.mxu0 0.0
    %423 = vmatpush1.msra.mxu0 0.0
    %424 = vmatprep.subr.mxu0 0.0
    %425 = vmatpush1.msra.mxu0 0.0
    %426 = vmatprep.subr.mxu0 0.0
    %427 = vmatpush1.msra.mxu0 0.0
    %428 = vmatprep.subr.mxu0 0.0
    %429 = vmatpush1.msra.mxu0 0.0
    %430 = vmatprep.subr.mxu0 0.0
    %431 = vmatpush1.msra.mxu0 0.0
    %432 = vmatprep.subr.mxu0 0.0
    %433 = vmatpush1.msra.mxu0 0.0
    %434 = vmatprep.subr.mxu0 0.0
    %435 = vmatpush1.msra.mxu0 0.0
    %436 = vmatprep.subr.mxu0 0.0
    %437 = vmatpush1.msra.mxu0 0.0
    %438 = vmatprep.subr.mxu0 0.0
    %439 = vmatpush1.msra.mxu0 0.0
    %440 = vmatprep.subr.mxu0 0.0
    %441 = vmatpush1.msra.mxu0 0.0
    %442 = vmatprep.subr.mxu0 0.0
    %443 = vmatpush1.msra.mxu0 0.0
    %444 = vmatprep.subr.mxu0 0.0
    %445 = vmatpush1.msra.mxu0 0.0
    %446 = vmatprep.subr.mxu0 0.0
    %447 = vmatpush1.msra.mxu0 0.0
    %448 = vmatprep.subr.mxu0 0.0
    %449 = vmatpush1.msra.mxu0 %v407
    %450 = vmatprep.subr.mxu0 0.0
    %451 = vmatpush1.msra.mxu0 %v402
    %452 = vmatprep.subr.mxu0 0.0
    %453 = vmatpush2.msra.mxu0 0.0
    %454 = vmatprep.subr.mxu0 0.0
    %455 = vmatpush2.msra.mxu0 0.0
    %456 = vmatprep.subr.mxu0 0.0
    %457 = vmatpush2.msra.mxu0 0.0
    %458 = vmatprep.subr.mxu0 0.0
    %459 = vmatpush2.msra.mxu0 0.0
    %460 = vmatprep.subr.mxu0 0.0
    %461 = vmatpush2.msra.mxu0 0.0
    %462 = vmatprep.subr.mxu0 0.0
    %463 = vmatpush2.msra.mxu0 0.0
    %464 = vmatprep.subr.mxu0 0.0
    %465 = vmatpush2.msra.mxu0 0.0
    %466 = vmatprep.subr.mxu0 0.0
    %467 = vmatpush2.msra.mxu0 0.0
    %468 = vmatprep.subr.mxu0 0.0
    %469 = vmatpush2.msra.mxu0 0.0
    %470 = vmatprep.subr.mxu0 0.0
    %471 = vmatpush2.msra.mxu0 0.0
    %472 = vmatprep.subr.mxu0 0.0
    %473 = vmatpush2.msra.mxu0 0.0
    %474 = vmatprep.subr.mxu0 0.0
    %475 = vmatpush2.msra.mxu0 0.0
    %476 = vmatprep.subr.mxu0 0.0
    %477 = vmatpush2.msra.mxu0 0.0
    %478 = vmatprep.subr.mxu0 0.0
    %479 = vmatpush2.msra.mxu0 0.0
    %480 = vmatprep.subr.mxu0 0.0
    %481 = vmatpush2.msra.mxu0 0.0
    %482 = vmatprep.subr.mxu0 0.0
    %483 = vmatpush2.msra.mxu0 0.0
    %484 = vmatprep.mubr.f32.mxu0 0.0
    %485 = vmatmul.mubr.f32.gmra.mxu0 %v147
    %v486 = vpop.f32.mrf.mxu0
    %v487 = vadd.f32 0.0, %v486
    %v488 = vpop.f32.mrf.mxu0
    %489 = vmatprep.mubr.f32.mxu0 0.0
    %490 = vmatmul.mubr.f32.gmra.mxu0 %v150
    %v491 = vpop.f32.mrf.mxu0
    %v492 = vadd.f32 0.0, %v491
    %v493 = vpop.f32.mrf.mxu0
    %494 = vdwg.mxu0
    %495 = vmatprep.subr.mxu0 0.0
    %496 = vmatpush1.msra.mxu0 0.0
    %497 = vmatprep.subr.mxu0 0.0
    %498 = vmatpush1.msra.mxu0 0.0
    %499 = vmatprep.subr.mxu0 0.0
    %500 = vmatpush1.msra.mxu0 0.0
    %501 = vmatprep.subr.mxu0 0.0
    %502 = vmatpush1.msra.mxu0 0.0
    %503 = vmatprep.subr.mxu0 0.0
    %504 = vmatpush1.msra.mxu0 0.0
    %505 = vmatprep.subr.mxu0 0.0
    %506 = vmatpush1.msra.mxu0 0.0
    %507 = vmatprep.subr.mxu0 0.0
    %508 = vmatpush1.msra.mxu0 0.0
    %509 = vmatprep.subr.mxu0 0.0
    %510 = vmatpush1.msra.mxu0 0.0
    %511 = vmatprep.subr.mxu0 0.0
    %512 = vmatpush1.msra.mxu0 0.0
    %513 = vmatprep.subr.mxu0 0.0
    %514 = vmatpush1.msra.mxu0 0.0
    %515 = vmatprep.subr.mxu0 0.0
    %516 = vmatpush1.msra.mxu0 0.0
    %517 = vmatprep.subr.mxu0 0.0
    %518 = vmatpush1.msra.mxu0 0.0
    %519 = vmatprep.subr.mxu0 0.0
    %520 = vmatpush1.msra.mxu0 0.0
    %521 = vmatprep.subr.mxu0 0.0
    %522 = vmatpush1.msra.mxu0 0.0
    %523 = vmatprep.subr.mxu0 0.0
    %524 = vmatpush1.msra.mxu0 %v417
    %525 = vmatprep.subr.mxu0 0.0
    %526 = vmatpush1.msra.mxu0 %v412
    %527 = vmatprep.subr.mxu0 0.0
    %528 = vmatpush2.msra.mxu0 0.0
    %529 = vmatprep.subr.mxu0 0.0
    %530 = vmatpush2.msra.mxu0 0.0
    %531 = vmatprep.subr.mxu0 0.0
    %532 = vmatpush2.msra.mxu0 0.0
    %533 = vmatprep.subr.mxu0 0.0
    %534 = vmatpush2.msra.mxu0 0.0
    %535 = vmatprep.subr.mxu0 0.0
    %536 = vmatpush2.msra.mxu0 0.0
    %537 = vmatprep.subr.mxu0 0.0
    %538 = vmatpush2.msra.mxu0 0.0
    %539 = vmatprep.subr.mxu0 0.0
    %540 = vmatpush2.msra.mxu0 0.0
    %541 = vmatprep.subr.mxu0 0.0
    %542 = vmatpush2.msra.mxu0 0.0
    %543 = vmatprep.subr.mxu0 0.0
    %544 = vmatpush2.msra.mxu0 0.0
    %545 = vmatprep.subr.mxu0 0.0
    %546 = vmatpush2.msra.mxu0 0.0
    %547 = vmatprep.subr.mxu0 0.0
    %548 = vmatpush2.msra.mxu0 0.0
    %549 = vmatprep.subr.mxu0 0.0
    %550 = vmatpush2.msra.mxu0 0.0
    %551 = vmatprep.subr.mxu0 0.0
    %552 = vmatpush2.msra.mxu0 0.0
    %553 = vmatprep.subr.mxu0 0.0
    %554 = vmatpush2.msra.mxu0 0.0
    %555 = vmatprep.subr.mxu0 0.0
    %556 = vmatpush2.msra.mxu0 0.0
    %557 = vmatprep.subr.mxu0 0.0
    %558 = vmatpush2.msra.mxu0 0.0
    %559 = vmatprep.mubr.f32.mxu0 0.0
    %560 = vmatmul.mubr.f32.gmra.mxu0 %v228
    %v561 = vpop.f32.mrf.mxu0
    %v562 = vadd.f32 0.0, %v561
    %v563 = vpop.f32.mrf.mxu0
    %564 = vmatprep.mubr.f32.mxu0 0.0
    %565 = vmatmul.mubr.f32.gmra.mxu0 %v231
    %v566 = vpop.f32.mrf.mxu0
    %v567 = vadd.f32 0.0, %v566
    %v568 = vpop.f32.mrf.mxu0
    %569 = vdwg.mxu0
    %v570 = vlaneseq
    %v571 = vshrl.u32 %v570, 7
    %v572 = vsub.s32 0, %v571
    %v573 = vrot.slane %v322, %v572
    %v574 = vadd.f32 %v487, %v573
    %v575 = vadd.f32 %v492, %v573
    %v576 = vadd.f32 %v562, %v573
    %v577 = vadd.f32 %v567, %v573
    %v578 = vmax.f32 %v574, 0.0
    %v579 = vmax.f32 %v575, 0.0
    %v580 = vmax.f32 %v576, 0.0
    %v581 = vmax.f32 %v577, 0.0
    %v582 = vld [vmem:[#allocation2 + $0x28] sm:$0xff]
    %v583 = vld [vmem:[#allocation2 + $0x30] sm:$0xff]
    %v584 = vld [vmem:[#allocation2 + $0x38] sm:$0xff]
    %v585 = vld [vmem:[#allocation2 + $0x40] sm:$0xff]
    %v586 = vld [vmem:[#allocation2 + $0x48] sm:$0x1]
    %vm587 = vcmask 261120
    %v589 = vsel %vm587, %v578, 0
    %v592 = vsel %vm587, %v579, 0
    %v595 = vsel %vm587, %v580, 0
    %v598 = vsel %vm587, %v581, 0
    %600 = vmatprep.subr.mxu0 0.0
    %601 = vmatpush1.msra.mxu0 0.0
    %602 = vmatprep.subr.mxu0 0.0
    %603 = vmatpush1.msra.mxu0 0.0
    %604 = vmatprep.subr.mxu0 0.0
    %605 = vmatpush1.msra.mxu0 0.0
    %606 = vmatprep.subr.mxu0 0.0
    %607 = vmatpush1.msra.mxu0 0.0
    %608 = vmatprep.subr.mxu0 0.0
    %609 = vmatpush1.msra.mxu0 0.0
    %610 = vmatprep.subr.mxu0 0.0
    %611 = vmatpush1.msra.mxu0 0.0
    %612 = vmatprep.subr.mxu0 0.0
    %613 = vmatpush1.msra.mxu0 0.0
    %614 = vmatprep.subr.mxu0 0.0
    %615 = vmatpush1.msra.mxu0 0.0
    %616 = vmatprep.subr.mxu0 0.0
    %617 = vmatpush1.msra.mxu0 0.0
    %618 = vmatprep.subr.mxu0 0.0
    %619 = vmatpush1.msra.mxu0 0.0
    %620 = vmatprep.subr.mxu0 0.0
    %621 = vmatpush1.msra.mxu0 0.0
    %622 = vmatprep.subr.mxu0 0.0
    %623 = vmatpush1.msra.mxu0 0.0
    %624 = vmatprep.subr.mxu0 0.0
    %625 = vmatpush1.msra.mxu0 %v585
    %626 = vmatprep.subr.mxu0 0.0
    %627 = vmatpush1.msra.mxu0 %v584
    %628 = vmatprep.subr.mxu0 0.0
    %629 = vmatpush1.msra.mxu0 %v583
    %630 = vmatprep.subr.mxu0 0.0
    %631 = vmatpush1.msra.mxu0 %v582
    %632 = vmatprep.subr.mxu0 0.0
    %633 = vmatpush2.msra.mxu0 0.0
    %634 = vmatprep.subr.mxu0 0.0
    %635 = vmatpush2.msra.mxu0 0.0
    %636 = vmatprep.subr.mxu0 0.0
    %637 = vmatpush2.msra.mxu0 0.0
    %638 = vmatprep.subr.mxu0 0.0
    %639 = vmatpush2.msra.mxu0 0.0
    %640 = vmatprep.subr.mxu0 0.0
    %641 = vmatpush2.msra.mxu0 0.0
    %642 = vmatprep.subr.mxu0 0.0
    %643 = vmatpush2.msra.mxu0 0.0
    %644 = vmatprep.subr.mxu0 0.0
    %645 = vmatpush2.msra.mxu0 0.0
    %646 = vmatprep.subr.mxu0 0.0
    %647 = vmatpush2.msra.mxu0 0.0
    %648 = vmatprep.subr.mxu0 0.0
    %649 = vmatpush2.msra.mxu0 0.0
    %650 = vmatprep.subr.mxu0 0.0
    %651 = vmatpush2.msra.mxu0 0.0
    %652 = vmatprep.subr.mxu0 0.0
    %653 = vmatpush2.msra.mxu0 0.0
    %654 = vmatprep.subr.mxu0 0.0
    %655 = vmatpush2.msra.mxu0 0.0
    %656 = vmatprep.subr.mxu0 0.0
    %657 = vmatpush2.msra.mxu0 0.0
    %658 = vmatprep.subr.mxu0 0.0
    %659 = vmatpush2.msra.mxu0 0.0
    %660 = vmatprep.subr.mxu0 0.0
    %661 = vmatpush2.msra.mxu0 0.0
    %662 = vmatprep.subr.mxu0 0.0
    %663 = vmatpush2.msra.mxu0 0.0
    %664 = vmatprep.mubr.f32.mxu0 0.0
    %665 = vmatmul.mubr.f32.gmra.mxu0 %v589
    %v666 = vpop.f32.mrf.mxu0
    %v667 = vadd.f32 0.0, %v666
    %v668 = vpop.f32.mrf.mxu0
    %669 = vmatprep.mubr.f32.mxu0 0.0
    %670 = vmatmul.mubr.f32.gmra.mxu0 %v592
    %v671 = vpop.f32.mrf.mxu0
    %v672 = vadd.f32 0.0, %v671
    %v673 = vpop.f32.mrf.mxu0
    %674 = vmatprep.mubr.f32.mxu0 0.0
    %675 = vmatmul.mubr.f32.gmra.mxu0 %v595
    %v676 = vpop.f32.mrf.mxu0
    %v677 = vadd.f32 0.0, %v676
    %v678 = vpop.f32.mrf.mxu0
    %679 = vmatprep.mubr.f32.mxu0 0.0
    %680 = vmatmul.mubr.f32.gmra.mxu0 %v598
    %v681 = vpop.f32.mrf.mxu0
    %v682 = vadd.f32 0.0, %v681
    %v683 = vpop.f32.mrf.mxu0
    %684 = vdwg.mxu0
    %685 = vmatprep.subr.mxu0 0.0
    %686 = vmatpush1.msra.mxu0 0.0
    %687 = vmatprep.subr.mxu0 0.0
    %688 = vmatpush1.msra.mxu0 0.0
    %689 = vmatprep.subr.mxu0 0.0
    %690 = vmatpush1.msra.mxu0 0.0
    %691 = vmatprep.subr.mxu0 0.0
    %692 = vmatpush1.msra.mxu0 0.0
    %693 = vmatprep.subr.mxu0 0.0
    %694 = vmatpush1.msra.mxu0 0.0
    %695 = vmatprep.subr.mxu0 0.0
    %696 = vmatpush1.msra.mxu0 0.0
    %697 = vmatprep.subr.mxu0 0.0
    %698 = vmatpush1.msra.mxu0 0.0
    %699 = vmatprep.subr.mxu0 0.0
    %700 = vmatpush1.msra.mxu0 0.0
    %701 = vmatprep.subr.mxu0 0.0
    %702 = vmatpush1.msra.mxu0 0.0
    %703 = vmatprep.subr.mxu0 0.0
    %704 = vmatpush1.msra.mxu0 0.0
    %705 = vmatprep.subr.mxu0 0.0
    %706 = vmatpush1.msra.mxu0 0.0
    %707 = vmatprep.subr.mxu0 0.0
    %708 = vmatpush1.msra.mxu0 0.0
    %709 = vmatprep.subr.mxu0 0.0
    %710 = vmatpush1.msra.mxu0 0.0
    %711 = vmatprep.subr.mxu0 0.0
    %712 = vmatpush1.msra.mxu0 0.0
    %713 = vmatprep.subr.mxu0 0.0
    %714 = vmatpush1.msra.mxu0 %v672
    %715 = vmatprep.subr.mxu0 0.0
    %716 = vmatpush1.msra.mxu0 %v667
    %717 = vmatprep.subr.mxu0 0.0
    %718 = vmatpush2.msra.mxu0 0.0
    %719 = vmatprep.subr.mxu0 0.0
    %720 = vmatpush2.msra.mxu0 0.0
    %721 = vmatprep.subr.mxu0 0.0
    %722 = vmatpush2.msra.mxu0 0.0
    %723 = vmatprep.subr.mxu0 0.0
    %724 = vmatpush2.msra.mxu0 0.0
    %725 = vmatprep.subr.mxu0 0.0
    %726 = vmatpush2.msra.mxu0 0.0
    %727 = vmatprep.subr.mxu0 0.0
    %728 = vmatpush2.msra.mxu0 0.0
    %729 = vmatprep.subr.mxu0 0.0
    %730 = vmatpush2.msra.mxu0 0.0
    %731 = vmatprep.subr.mxu0 0.0
    %732 = vmatpush2.msra.mxu0 0.0
    %733 = vmatprep.subr.mxu0 0.0
    %734 = vmatpush2.msra.mxu0 0.0
    %735 = vmatprep.subr.mxu0 0.0
    %736 = vmatpush2.msra.mxu0 0.0
    %737 = vmatprep.subr.mxu0 0.0
    %738 = vmatpush2.msra.mxu0 0.0
    %739 = vmatprep.subr.mxu0 0.0
    %740 = vmatpush2.msra.mxu0 0.0
    %741 = vmatprep.subr.mxu0 0.0
    %742 = vmatpush2.msra.mxu0 0.0
    %743 = vmatprep.subr.mxu0 0.0
    %744 = vmatpush2.msra.mxu0 0.0
    %745 = vmatprep.subr.mxu0 0.0
    %746 = vmatpush2.msra.mxu0 0.0
    %747 = vmatprep.subr.mxu0 0.0
    %748 = vmatpush2.msra.mxu0 0.0
    %749 = vmatprep.mubr.f32.mxu0 0.0
    %750 = vmatmul.mubr.f32.gmra.mxu0 %v147
    %v751 = vpop.f32.mrf.mxu0
    %v752 = vadd.f32 0.0, %v751
    %v753 = vpop.f32.mrf.mxu0
    %754 = vmatprep.mubr.f32.mxu0 0.0
    %755 = vmatmul.mubr.f32.gmra.mxu0 %v150
    %v756 = vpop.f32.mrf.mxu0
    %v757 = vadd.f32 0.0, %v756
    %v758 = vpop.f32.mrf.mxu0
    %759 = vdwg.mxu0
    %760 = vmatprep.subr.mxu0 0.0
    %761 = vmatpush1.msra.mxu0 0.0
    %762 = vmatprep.subr.mxu0 0.0
    %763 = vmatpush1.msra.mxu0 0.0
    %764 = vmatprep.subr.mxu0 0.0
    %765 = vmatpush1.msra.mxu0 0.0
    %766 = vmatprep.subr.mxu0 0.0
    %767 = vmatpush1.msra.mxu0 0.0
    %768 = vmatprep.subr.mxu0 0.0
    %769 = vmatpush1.msra.mxu0 0.0
    %770 = vmatprep.subr.mxu0 0.0
    %771 = vmatpush1.msra.mxu0 0.0
    %772 = vmatprep.subr.mxu0 0.0
    %773 = vmatpush1.msra.mxu0 0.0
    %774 = vmatprep.subr.mxu0 0.0
    %775 = vmatpush1.msra.mxu0 0.0
    %776 = vmatprep.subr.mxu0 0.0
    %777 = vmatpush1.msra.mxu0 0.0
    %778 = vmatprep.subr.mxu0 0.0
    %779 = vmatpush1.msra.mxu0 0.0
    %780 = vmatprep.subr.mxu0 0.0
    %781 = vmatpush1.msra.mxu0 0.0
    %782 = vmatprep.subr.mxu0 0.0
    %783 = vmatpush1.msra.mxu0 0.0
    %784 = vmatprep.subr.mxu0 0.0
    %785 = vmatpush1.msra.mxu0 0.0
    %786 = vmatprep.subr.mxu0 0.0
    %787 = vmatpush1.msra.mxu0 0.0
    %788 = vmatprep.subr.mxu0 0.0
    %789 = vmatpush1.msra.mxu0 %v682
    %790 = vmatprep.subr.mxu0 0.0
    %791 = vmatpush1.msra.mxu0 %v677
    %792 = vmatprep.subr.mxu0 0.0
    %793 = vmatpush2.msra.mxu0 0.0
    %794 = vmatprep.subr.mxu0 0.0
    %795 = vmatpush2.msra.mxu0 0.0
    %796 = vmatprep.subr.mxu0 0.0
    %797 = vmatpush2.msra.mxu0 0.0
    %798 = vmatprep.subr.mxu0 0.0
    %799 = vmatpush2.msra.mxu0 0.0
    %800 = vmatprep.subr.mxu0 0.0
    %801 = vmatpush2.msra.mxu0 0.0
    %802 = vmatprep.subr.mxu0 0.0
    %803 = vmatpush2.msra.mxu0 0.0
    %804 = vmatprep.subr.mxu0 0.0
    %805 = vmatpush2.msra.mxu0 0.0
    %806 = vmatprep.subr.mxu0 0.0
    %807 = vmatpush2.msra.mxu0 0.0
    %808 = vmatprep.subr.mxu0 0.0
    %809 = vmatpush2.msra.mxu0 0.0
    %810 = vmatprep.subr.mxu0 0.0
    %811 = vmatpush2.msra.mxu0 0.0
    %812 = vmatprep.subr.mxu0 0.0
    %813 = vmatpush2.msra.mxu0 0.0
    %814 = vmatprep.subr.mxu0 0.0
    %815 = vmatpush2.msra.mxu0 0.0
    %816 = vmatprep.subr.mxu0 0.0
    %817 = vmatpush2.msra.mxu0 0.0
    %818 = vmatprep.subr.mxu0 0.0
    %819 = vmatpush2.msra.mxu0 0.0
    %820 = vmatprep.subr.mxu0 0.0
    %821 = vmatpush2.msra.mxu0 0.0
    %822 = vmatprep.subr.mxu0 0.0
    %823 = vmatpush2.msra.mxu0 0.0
    %824 = vmatprep.mubr.f32.mxu0 0.0
    %825 = vmatmul.mubr.f32.gmra.mxu0 %v228
    %v826 = vpop.f32.mrf.mxu0
    %v827 = vadd.f32 0.0, %v826
    %v828 = vpop.f32.mrf.mxu0
    %829 = vmatprep.mubr.f32.mxu0 0.0
    %830 = vmatmul.mubr.f32.gmra.mxu0 %v231
    %v831 = vpop.f32.mrf.mxu0
    %v832 = vadd.f32 0.0, %v831
    %v833 = vpop.f32.mrf.mxu0
    %834 = vdwg.mxu0
    %v835 = vlaneseq
    %v836 = vshrl.u32 %v835, 7
    %v837 = vsub.s32 0, %v836
    %v838 = vrot.slane %v586, %v837
    %v839 = vadd.f32 %v752, %v838
    %v840 = vadd.f32 %v757, %v838
    %v841 = vadd.f32 %v827, %v838
    %v842 = vadd.f32 %v832, %v838
    %v843 = vmax.f32 %v839, 0.0
    %v844 = vmax.f32 %v840, 0.0
    %v845 = vmax.f32 %v841, 0.0
    %v846 = vmax.f32 %v842, 0.0
    %vm847 = vcmask 392192
    %v848 = vsel %vm847, %v843, -inf
    %v849 = vsel %vm847, %v844, -inf
    %v850 = vmax.f32 %v848, %v849
    %v851 = vrot.slane %v850, 4
    %v852 = vmax.f32 %v850, %v851
    %v853 = vrot.slane %v852, 2
    %v854 = vmax.f32 %v852, %v853
    %v855 = vrot.slane %v854, 1
    %v856 = vmax.f32 %v854, %v855
    %v857 = vsel %vm847, %v845, -inf
    %v858 = vsel %vm847, %v846, -inf
    %v859 = vmax.f32 %v857, %v858
    %v860 = vrot.slane %v859, 4
    %v861 = vmax.f32 %v859, %v860
    %v862 = vrot.slane %v861, 2
    %v863 = vmax.f32 %v861, %v862
    %v864 = vrot.slane %v863, 1
    %v865 = vmax.f32 %v863, %v864
    %v866 = vld [vmem:[#allocation2 + $0x50] sm:$0xff]
    %v867 = vld [vmem:[#allocation2 + $0x58] sm:$0xff]
    %v868 = vld [vmem:[#allocation2 + $0x60] sm:$0xff]
    %v869 = vld [vmem:[#allocation2 + $0x68] sm:$0xff]
    %v870 = vld [vmem:[#allocation2 + $0x70] sm:$0xff]
    %v871 = vld [vmem:[#allocation2 + $0x78] sm:$0xff]
    %v872 = vld [vmem:[#allocation2 + $0x80] sm:$0x1]
    %v873 = vlaneseq
    %v874 = vshrl.u32 %v873, 7
    %v875 = vsub.s32 0, %v874
    %v876 = vrot.slane %v872, %v875
    %vm879 = vcmask 1041409
    %v880 = vsel %vm879, %v865, %v856
    %v881 = vsel %vm847, %v880, 0
    %883 = vmatprep.subr.mxu0 0.0
    %884 = vmatpush1.msra.mxu0 0.0
    %885 = vmatprep.subr.mxu0 0.0
    %886 = vmatpush1.msra.mxu0 0.0
    %887 = vmatprep.subr.mxu0 0.0
    %888 = vmatpush1.msra.mxu0 0.0
    %889 = vmatprep.subr.mxu0 0.0
    %890 = vmatpush1.msra.mxu0 0.0
    %891 = vmatprep.subr.mxu0 0.0
    %892 = vmatpush1.msra.mxu0 0.0
    %893 = vmatprep.subr.mxu0 0.0
    %894 = vmatpush1.msra.mxu0 0.0
    %895 = vmatprep.subr.mxu0 0.0
    %896 = vmatpush1.msra.mxu0 0.0
    %897 = vmatprep.subr.mxu0 0.0
    %898 = vmatpush1.msra.mxu0 0.0
    %899 = vmatprep.subr.mxu0 0.0
    %900 = vmatpush1.msra.mxu0 0.0
    %901 = vmatprep.subr.mxu0 0.0
    %902 = vmatpush1.msra.mxu0 0.0
    %903 = vmatprep.subr.mxu0 0.0
    %904 = vmatpush1.msra.mxu0 %v871
    %905 = vmatprep.subr.mxu0 0.0
    %906 = vmatpush1.msra.mxu0 %v870
    %907 = vmatprep.subr.mxu0 0.0
    %908 = vmatpush1.msra.mxu0 %v869
    %909 = vmatprep.subr.mxu0 0.0
    %910 = vmatpush1.msra.mxu0 %v868
    %911 = vmatprep.subr.mxu0 0.0
    %912 = vmatpush1.msra.mxu0 %v867
    %913 = vmatprep.subr.mxu0 0.0
    %914 = vmatpush1.msra.mxu0 %v866
    %915 = vmatprep.subr.mxu0 0.0
    %916 = vmatpush2.msra.mxu0 0.0
    %917 = vmatprep.subr.mxu0 0.0
    %918 = vmatpush2.msra.mxu0 0.0
    %919 = vmatprep.subr.mxu0 0.0
    %920 = vmatpush2.msra.mxu0 0.0
    %921 = vmatprep.subr.mxu0 0.0
    %922 = vmatpush2.msra.mxu0 0.0
    %923 = vmatprep.subr.mxu0 0.0
    %924 = vmatpush2.msra.mxu0 0.0
    %925 = vmatprep.subr.mxu0 0.0
    %926 = vmatpush2.msra.mxu0 0.0
    %927 = vmatprep.subr.mxu0 0.0
    %928 = vmatpush2.msra.mxu0 0.0
    %929 = vmatprep.subr.mxu0 0.0
    %930 = vmatpush2.msra.mxu0 0.0
    %931 = vmatprep.subr.mxu0 0.0
    %932 = vmatpush2.msra.mxu0 0.0
    %933 = vmatprep.subr.mxu0 0.0
    %934 = vmatpush2.msra.mxu0 0.0
    %935 = vmatprep.subr.mxu0 0.0
    %936 = vmatpush2.msra.mxu0 0.0
    %937 = vmatprep.subr.mxu0 0.0
    %938 = vmatpush2.msra.mxu0 0.0
    %939 = vmatprep.subr.mxu0 0.0
    %940 = vmatpush2.msra.mxu0 0.0
    %941 = vmatprep.subr.mxu0 0.0
    %942 = vmatpush2.msra.mxu0 0.0
    %943 = vmatprep.subr.mxu0 0.0
    %944 = vmatpush2.msra.mxu0 0.0
    %945 = vmatprep.subr.mxu0 0.0
    %946 = vmatpush2.msra.mxu0 0.0
    %947 = vmatprep.mubr.f32.mxu0 0.0
    %948 = vmatmul.mubr.f32.gmra.mxu0 %v881
    %v949 = vpop.f32.mrf.mxu0
    %v950 = vadd.f32 %v876, %v949
    %v951 = vpop.f32.mrf.mxu0
    %952 = vdwg.mxu0
    %v953 = vmax.f32 %v950, 0.0
    %v954 = vld [vmem:[#allocation2 + $0x88] sm:$0xff]
    %v955 = vld [vmem:[#allocation2 + $0x90] sm:$0xff]
    %v956 = vld [vmem:[#allocation2 + $0x98] sm:$0xff]
    %v957 = vld [vmem:[#allocation2 + $0xa0] sm:$0x1]
    %v958 = vlaneseq
    %v959 = vshrl.u32 %v958, 7
    %v960 = vsub.s32 0, %v959
    %v961 = vrot.slane %v957, %v960
    %vm962 = vcmask 195584
    %v964 = vsel %vm962, %v953, 0
    %966 = vmatprep.subr.mxu0 0.0
    %967 = vmatpush1.msra.mxu0 0.0
    %968 = vmatprep.subr.mxu0 0.0
    %969 = vmatpush1.msra.mxu0 0.0
    %970 = vmatprep.subr.mxu0 0.0
    %971 = vmatpush1.msra.mxu0 0.0
    %972 = vmatprep.subr.mxu0 0.0
    %973 = vmatpush1.msra.mxu0 0.0
    %974 = vmatprep.subr.mxu0 0.0
    %975 = vmatpush1.msra.mxu0 0.0
    %976 = vmatprep.subr.mxu0 0.0
    %977 = vmatpush1.msra.mxu0 0.0
    %978 = vmatprep.subr.mxu0 0.0
    %979 = vmatpush1.msra.mxu0 0.0
    %980 = vmatprep.subr.mxu0 0.0
    %981 = vmatpush1.msra.mxu0 0.0
    %982 = vmatprep.subr.mxu0 0.0
    %983 = vmatpush1.msra.mxu0 0.0
    %984 = vmatprep.subr.mxu0 0.0
    %985 = vmatpush1.msra.mxu0 0.0
    %986 = vmatprep.subr.mxu0 0.0
    %987 = vmatpush1.msra.mxu0 0.0
    %988 = vmatprep.subr.mxu0 0.0
    %989 = vmatpush1.msra.mxu0 0.0
    %990 = vmatprep.subr.mxu0 0.0
    %991 = vmatpush1.msra.mxu0 0.0
    %992 = vmatprep.subr.mxu0 0.0
    %993 = vmatpush1.msra.mxu0 %v956
    %994 = vmatprep.subr.mxu0 0.0
    %995 = vmatpush1.msra.mxu0 %v955
    %996 = vmatprep.subr.mxu0 0.0
    %997 = vmatpush1.msra.mxu0 %v954
    %998 = vmatprep.subr.mxu0 0.0
    %999 = vmatpush2.msra.mxu0 0.0
    %1000 = vmatprep.subr.mxu0 0.0
    %1001 = vmatpush2.msra.mxu0 0.0
    %1002 = vmatprep.subr.mxu0 0.0
    %1003 = vmatpush2.msra.mxu0 0.0
    %1004 = vmatprep.subr.mxu0 0.0
    %1005 = vmatpush2.msra.mxu0 0.0
    %1006 = vmatprep.subr.mxu0 0.0
    %1007 = vmatpush2.msra.mxu0 0.0
    %1008 = vmatprep.subr.mxu0 0.0
    %1009 = vmatpush2.msra.mxu0 0.0
    %1010 = vmatprep.subr.mxu0 0.0
    %1011 = vmatpush2.msra.mxu0 0.0
    %1012 = vmatprep.subr.mxu0 0.0
    %1013 = vmatpush2.msra.mxu0 0.0
    %1014 = vmatprep.subr.mxu0 0.0
    %1015 = vmatpush2.msra.mxu0 0.0
    %1016 = vmatprep.subr.mxu0 0.0
    %1017 = vmatpush2.msra.mxu0 0.0
    %1018 = vmatprep.subr.mxu0 0.0
    %1019 = vmatpush2.msra.mxu0 0.0
    %1020 = vmatprep.subr.mxu0 0.0
    %1021 = vmatpush2.msra.mxu0 0.0
    %1022 = vmatprep.subr.mxu0 0.0
    %1023 = vmatpush2.msra.mxu0 0.0
    %1024 = vmatprep.subr.mxu0 0.0
    %1025 = vmatpush2.msra.mxu0 0.0
    %1026 = vmatprep.subr.mxu0 0.0
    %1027 = vmatpush2.msra.mxu0 0.0
    %1028 = vmatprep.subr.mxu0 0.0
    %1029 = vmatpush2.msra.mxu0 0.0
    %1030 = vmatprep.mubr.f32.mxu0 0.0
    %1031 = vmatmul.mubr.f32.gmra.mxu0 %v964
    %v1032 = vpop.f32.mrf.mxu0
    %v1033 = vadd.f32 %v961, %v1032
    %v1034 = vpop.f32.mrf.mxu0
    %1035 = vdwg.mxu0
    %1036 = vst [vmem:[#allocation5] sm:$0x3] %v1033
    // Predicated region
    $region18: #{tpu_custom_call.1} parent=1 // pred_check
      _
    $region19: #{tpu_custom_call.1} parent=1 // pred_check_branch
      %1038 = sbr.rel (0) target = $region21
    $region20: #{tpu_custom_call.1} parent=1 // pred_region
      %s1040 = ssub.s32 32, 32
      %1041 = vsyncadd [#allocation4], %s1040
      %s1043 = sshll.u32 [#allocation5], 4
      %s1044 = int_to_ptr.vmem [resolvable:$true] %s1043
      %1046 = dma.vmem_to_hbm [thread:$0]  %s1044, 32, %s3, [#allocation4]
    $region21: #{tpu_custom_call.1} parent=1 // pred_fallthru
      _
    // Predicated region
    $region22: #{tpu_custom_call.1} parent=1 // pred_check
      _
    $region23: #{tpu_custom_call.1} parent=1 // pred_check_branch
      %1048 = sbr.rel (0) target = $region25
    $region24: #{tpu_custom_call.1} parent=1 // pred_region
      %1049 = dma.done [#allocation4], 32
    $region25: #{tpu_custom_call.1} parent=1 // pred_fallthru
      _
    %1050 = vsyncpa [#allocation3], 1
    %1051 = vsyncpa [#allocation4], 1

</llo_original>
